<compile_context>
chip_gen: v7x
topology: tpu7x:2x2x1
jax: 0.10.0
libtpu: 0.0.40
codegen_flags: <defaults>
</compile_context>

<pallas_src>
import functools

import jax
import jax.numpy as jnp
from jax import lax
from jax.experimental import pallas as pl
from jax.experimental.pallas import tpu as pltpu


def _choose_row_tile(S, D, itemsize, max_rows=512, block_budget_bytes=2 << 20):
    """Largest tS <= max_rows with tS % 8 == 0, S % tS == 0 and tS*D*itemsize
    under the block budget; falls back to the full S (always a legal block)."""
    cap = max(8, min(S, max_rows, block_budget_bytes // max(1, D * itemsize)))
    cap -= cap % 8
    for ts in range(cap, 7, -8):
        if S % ts == 0:
            return ts
    return S


def _hiercdf_kernel(idx_ref, preds_ref, labels_ref, cp_ref, cn_ref, out_ref,
                    *, ts, inv_b, factor, unroll):
    i = pl.program_id(0)

    @pl.when(i == 0)
    def _init():
        out_ref[0, 0] = 0.0

    # ---- monotonicity penalty for this S tile (native dtype -> f32 on VPU) ----
    diff = jnp.maximum(
        cn_ref[...].astype(jnp.float32) - cp_ref[...].astype(jnp.float32), 0.0)
    row_sums = jnp.sum(diff, axis=1, keepdims=True)                 # (tS, 1)

    # Per-row hit counts for this tile via a scalar (SMEM) gather over
    # student_idx -- no (S, B) intermediate is ever materialized.
    start = i * ts
    row_ids = lax.broadcasted_iota(jnp.int32, (ts, 1), 0) + start   # (tS, 1)
    B = idx_ref.shape[0]

    def body(b, counts):
        return counts + (row_ids == idx_ref[b]).astype(jnp.float32)

    counts = lax.fori_loop(0, B, body, jnp.zeros((ts, 1), jnp.float32),
                           unroll=unroll)
    # NOTE: indices outside [0, S) silently contribute zero (assumed valid).
    out_ref[0, 0] += jnp.sum(counts * row_sums)

    # ---- BCE (mean) + final combine, exactly once, at the last grid step ----
    @pl.when(i == pl.num_programs(0) - 1)
    def _finalize():
        p = preds_ref[...].astype(jnp.float32)
        y = labels_ref[...].astype(jnp.float32)
        # torch.nn.BCELoss clamps log at -100; padded (p=1, y=1) rows give 0.
        log_p = jnp.maximum(jnp.log(p), -100.0)
        log_1mp = jnp.maximum(jnp.log(1.0 - p), -100.0)
        bce = jnp.sum(-(y * log_p + (1.0 - y) * log_1mp)) * inv_b
        out_ref[0, 0] = bce + factor * out_ref[0, 0]


def hiercdf_loss(student_idx, preds, labels, condi_p, condi_n,
                 *, factor=0.001, max_rows_per_tile=512):
    """student_idx: [B] int, preds/labels: [B], condi_*: [S, D] (native dtype)."""
    S, D = condi_p.shape
    true_b = preds.shape[0]

    # Lane-dense BCE inputs: pad B to a multiple of 128 with (p=1, y=1)
    # dummies (exactly zero contribution to the BCE *sum*).
    b_pad = -true_b % 128
    if b_pad:
        preds = jnp.concatenate([preds, jnp.ones((b_pad,), preds.dtype)])
        labels = jnp.concatenate([labels, jnp.ones((b_pad,), labels.dtype)])
    bp = true_b + b_pad
    preds2 = preds.reshape(bp // 128, 128)
    labels2 = labels.reshape(bp // 128, 128)
    idx = student_idx.astype(jnp.int32)

    itemsize = condi_p.dtype.itemsize
    ts = _choose_row_tile(S, D, itemsize, max_rows=max_rows_per_tile)
    nst = S // ts

    kernel = functools.partial(
        _hiercdf_kernel, ts=ts, inv_b=1.0 / float(true_b),
        factor=float(factor), unroll=bool(true_b <= 32))

    grid_spec = pltpu.PrefetchScalarGridSpec(
        num_scalar_prefetch=1,                 # student_idx -> SMEM
        grid=(nst,),
        in_specs=[
            pl.BlockSpec((bp // 128, 128), lambda i, idx_r: (0, 0)),  # preds
            pl.BlockSpec((bp // 128, 128), lambda i, idx_r: (0, 0)),  # labels
            pl.BlockSpec((ts, D), lambda i, idx_r: (i, 0)),           # condi_p
            pl.BlockSpec((ts, D), lambda i, idx_r: (i, 0)),           # condi_n
        ],
        out_specs=pl.BlockSpec(memory_space=pltpu.MemorySpace.SMEM),  # scalar out
    )

    # VMEM budget guard: double-buffered (tS, D) blocks of both tables plus the
    # resident BCE tiles.  The tile chooser keeps this below v5e's 16 MiB
    # scoped default; only the "no legal tile" fallback raises the limit.
    vmem_est = (4 * ts * D * itemsize
                + 4 * preds2.size * preds2.dtype.itemsize + (2 << 20))
    cp_kwargs = dict(dimension_semantics=("arbitrary",))
    if vmem_est > (16 << 20):
        cp_kwargs["vmem_limit_bytes"] = min(vmem_est + (16 << 20), 64 << 20)

    out = pl.pallas_call(
        kernel,
        out_shape=jax.ShapeDtypeStruct((1, 1), jnp.float32),
        grid_spec=grid_spec,
        compiler_params=pltpu.CompilerParams(**cp_kwargs),
    )(idx, preds2, labels2, condi_p, condi_n)
    return out[0, 0]


def hiercdf_loss_ref(student_idx, preds, labels, condi_p, condi_n, factor=0.001):
    log_p = jnp.maximum(jnp.log(preds), -100.0)
    log_1mp = jnp.maximum(jnp.log(1.0 - preds), -100.0)
    bce = jnp.mean(-(labels * log_p + (1.0 - labels) * log_1mp))
    pen = jnp.sum(jnp.maximum(condi_n[student_idx, :] - condi_p[student_idx, :], 0.0))
    return bce + factor * pen


if __name__ == "__main__":
    key = jax.random.PRNGKey(0)
    k1, k2, k3, k4, k5 = jax.random.split(key, 5)

    num_students, know_dim, batch = 64, 128, 8

    # Deterministic "parameters" of the parent module (native dtype, no casts).
    condi_p = jax.random.uniform(k1, (num_students, know_dim), jnp.float32)
    condi_n = jax.random.uniform(k2, (num_students, know_dim), jnp.float32)

    # Forward inputs.
    student_idx = jax.random.randint(k3, (batch,), 0, num_students, jnp.int32)
    preds = jax.nn.sigmoid(jax.random.normal(k4, (batch,), jnp.float32))
    labels = (jax.random.uniform(k5, (batch,)) > 0.5).astype(jnp.float32)

    # max_rows_per_tile=32 -> grid=(2,) so the tiled accumulation path is
    # exercised even at this small demo size.
    loss = hiercdf_loss(student_idx, preds, labels, condi_p, condi_n,
                        max_rows_per_tile=32)
    loss = jax.block_until_ready(loss)

    ref = hiercdf_loss_ref(student_idx, preds, labels, condi_p, condi_n)
    assert jnp.allclose(loss, ref, rtol=1e-5, atol=1e-5), (loss, ref)

    print("KERNEL_OK")
</pallas_src>

<mosaic_0001>
module attributes {stable_mosaic.version = 11 : i64} {
  func.func @_hiercdf_kernel(%arg0: i32, %arg1: memref<8xi32, #tpu.memory_space<smem>>, %arg2: memref<1x128xf32, #tpu.memory_space<vmem>>, %arg3: memref<1x128xf32, #tpu.memory_space<vmem>>, %arg4: memref<32x128xf32, #tpu.memory_space<vmem>>, %arg5: memref<32x128xf32, #tpu.memory_space<vmem>>, %arg6: memref<1x1xf32, #tpu.memory_space<smem>>) attributes {dimension_semantics = [#tpu.dimension_semantics<arbitrary>], iteration_bounds = array<i64: 2>, scalar_prefetch = 1 : i64, scratch_operands = 0 : i64, tpu.core_type = #tpu.core_type<tc>, window_params = [{pipeline_mode = #tpu.pipeline_mode<synchronous>, transform_indices = @transform_0, window_bounds = array<i64: 1, 128>}, {pipeline_mode = #tpu.pipeline_mode<synchronous>, transform_indices = @transform_1, window_bounds = array<i64: 1, 128>}, {transform_indices = @transform_2, window_bounds = array<i64: 32, 128>}, {transform_indices = @transform_3, window_bounds = array<i64: 32, 128>}, {transform_indices = @transform_4, window_bounds = array<i64: 1, 1>}]} {
    %c0_i32 = arith.constant 0 : i32
    %0 = arith.cmpi eq, %arg0, %c0_i32 : i32
    %1 = arith.extui %0 : i1 to i32
    %c0_i32_0 = arith.constant 0 : i32
    %2 = arith.cmpi ne, %1, %c0_i32_0 : i32
    scf.if %2 {
      %cst_14 = arith.constant 0.000000e+00 : f32
      %c0_15 = arith.constant 0 : index
      %c0_16 = arith.constant 0 : index
      %82 = memref.load %arg6[%c0_15, %c0_16] : memref<1x1xf32, #tpu.memory_space<smem>>
      memref.store %cst_14, %arg6[%c0_15, %c0_16] : memref<1x1xf32, #tpu.memory_space<smem>>
    } else {
    }
    %c0 = arith.constant 0 : index
    %c0_1 = arith.constant 0 : index
    %3 = vector.load %arg5[%c0, %c0_1] : memref<32x128xf32, #tpu.memory_space<vmem>>, vector<32x128xf32>
    %c0_2 = arith.constant 0 : index
    %c0_3 = arith.constant 0 : index
    %4 = vector.load %arg4[%c0_2, %c0_3] : memref<32x128xf32, #tpu.memory_space<vmem>>, vector<32x128xf32>
    %5 = arith.subf %3, %4 : vector<32x128xf32>
    %cst = arith.constant 0.000000e+00 : f32
    %6 = vector.broadcast %cst : f32 to vector<32x128xf32>
    %7 = arith.maximumf %5, %6 : vector<32x128xf32>
    %cst_4 = arith.constant dense<0.000000e+00> : vector<32xf32>
    %8 = vector.multi_reduction <add>, %7, %cst_4 [1] : vector<32x128xf32> to vector<32xf32>
    %9 = vector.shape_cast %8 : vector<32xf32> to vector<32x1xf32>
    %c32_i32 = arith.constant 32 : i32
    %10 = arith.muli %arg0, %c32_i32 : i32
    %11 = tpu.iota {dimensions = array<i32: 0>} : vector<32x1xi32>
    %12 = vector.broadcast %10 : i32 to vector<32x1xi32>
    %13 = arith.addi %11, %12 : vector<32x1xi32>
    %cst_5 = arith.constant 0.000000e+00 : f32
    %14 = vector.broadcast %cst_5 : f32 to vector<32x1xf32>
    %c0_i32_6 = arith.constant 0 : i32
    %15 = arith.index_cast %c0_i32_6 : i32 to index
    %16 = memref.load %arg1[%15] : memref<8xi32, #tpu.memory_space<smem>>
    %17 = vector.broadcast %16 : i32 to vector<32x1xi32>
    %18 = arith.cmpi eq, %13, %17 : vector<32x1xi32>
    %19 = arith.extui %18 : vector<32x1xi1> to vector<32x1xi32>
    %20 = arith.sitofp %19 : vector<32x1xi32> to vector<32x1xf32>
    %21 = arith.addf %14, %20 : vector<32x1xf32>
    %c1_i32 = arith.constant 1 : i32
    %22 = arith.index_cast %c1_i32 : i32 to index
    %23 = memref.load %arg1[%22] : memref<8xi32, #tpu.memory_space<smem>>
    %24 = vector.broadcast %23 : i32 to vector<32x1xi32>
    %25 = arith.cmpi eq, %13, %24 : vector<32x1xi32>
    %26 = arith.extui %25 : vector<32x1xi1> to vector<32x1xi32>
    %27 = arith.sitofp %26 : vector<32x1xi32> to vector<32x1xf32>
    %28 = arith.addf %21, %27 : vector<32x1xf32>
    %c2_i32 = arith.constant 2 : i32
    %29 = arith.index_cast %c2_i32 : i32 to index
    %30 = memref.load %arg1[%29] : memref<8xi32, #tpu.memory_space<smem>>
    %31 = vector.broadcast %30 : i32 to vector<32x1xi32>
    %32 = arith.cmpi eq, %13, %31 : vector<32x1xi32>
    %33 = arith.extui %32 : vector<32x1xi1> to vector<32x1xi32>
    %34 = arith.sitofp %33 : vector<32x1xi32> to vector<32x1xf32>
    %35 = arith.addf %28, %34 : vector<32x1xf32>
    %c3_i32 = arith.constant 3 : i32
    %36 = arith.index_cast %c3_i32 : i32 to index
    %37 = memref.load %arg1[%36] : memref<8xi32, #tpu.memory_space<smem>>
    %38 = vector.broadcast %37 : i32 to vector<32x1xi32>
    %39 = arith.cmpi eq, %13, %38 : vector<32x1xi32>
    %40 = arith.extui %39 : vector<32x1xi1> to vector<32x1xi32>
    %41 = arith.sitofp %40 : vector<32x1xi32> to vector<32x1xf32>
    %42 = arith.addf %35, %41 : vector<32x1xf32>
    %c4_i32 = arith.constant 4 : i32
    %43 = arith.index_cast %c4_i32 : i32 to index
    %44 = memref.load %arg1[%43] : memref<8xi32, #tpu.memory_space<smem>>
    %45 = vector.broadcast %44 : i32 to vector<32x1xi32>
    %46 = arith.cmpi eq, %13, %45 : vector<32x1xi32>
    %47 = arith.extui %46 : vector<32x1xi1> to vector<32x1xi32>
    %48 = arith.sitofp %47 : vector<32x1xi32> to vector<32x1xf32>
    %49 = arith.addf %42, %48 : vector<32x1xf32>
    %c5_i32 = arith.constant 5 : i32
    %50 = arith.index_cast %c5_i32 : i32 to index
    %51 = memref.load %arg1[%50] : memref<8xi32, #tpu.memory_space<smem>>
    %52 = vector.broadcast %51 : i32 to vector<32x1xi32>
    %53 = arith.cmpi eq, %13, %52 : vector<32x1xi32>
    %54 = arith.extui %53 : vector<32x1xi1> to vector<32x1xi32>
    %55 = arith.sitofp %54 : vector<32x1xi32> to vector<32x1xf32>
    %56 = arith.addf %49, %55 : vector<32x1xf32>
    %c6_i32 = arith.constant 6 : i32
    %57 = arith.index_cast %c6_i32 : i32 to index
    %58 = memref.load %arg1[%57] : memref<8xi32, #tpu.memory_space<smem>>
    %59 = vector.broadcast %58 : i32 to vector<32x1xi32>
    %60 = arith.cmpi eq, %13, %59 : vector<32x1xi32>
    %61 = arith.extui %60 : vector<32x1xi1> to vector<32x1xi32>
    %62 = arith.sitofp %61 : vector<32x1xi32> to vector<32x1xf32>
    %63 = arith.addf %56, %62 : vector<32x1xf32>
    %c7_i32 = arith.constant 7 : i32
    %64 = arith.index_cast %c7_i32 : i32 to index
    %65 = memref.load %arg1[%64] : memref<8xi32, #tpu.memory_space<smem>>
    %66 = vector.broadcast %65 : i32 to vector<32x1xi32>
    %67 = arith.cmpi eq, %13, %66 : vector<32x1xi32>
    %68 = arith.extui %67 : vector<32x1xi1> to vector<32x1xi32>
    %69 = arith.sitofp %68 : vector<32x1xi32> to vector<32x1xf32>
    %70 = arith.addf %63, %69 : vector<32x1xf32>
    %c8_i32 = arith.constant 8 : i32
    %c0_7 = arith.constant 0 : index
    %c0_8 = arith.constant 0 : index
    %71 = memref.load %arg6[%c0_7, %c0_8] : memref<1x1xf32, #tpu.memory_space<smem>>
    %72 = arith.mulf %70, %9 : vector<32x1xf32>
    %73 = vector.shape_cast %72 : vector<32x1xf32> to vector<1x32x1xf32>
    %cst_9 = arith.constant dense<0.000000e+00> : vector<1xf32>
    %74 = vector.multi_reduction <add>, %73, %cst_9 [1, 2] : vector<1x32x1xf32> to vector<1xf32>
    %75 = vector.shape_cast %74 : vector<1xf32> to vector<1x1x1xf32>
    %76 = vector.extract %75[0, 0, 0] : f32 from vector<1x1x1xf32>
    %77 = arith.addf %71, %76 : f32
    %c0_10 = arith.constant 0 : index
    %c0_11 = arith.constant 0 : index
    %78 = memref.load %arg6[%c0_10, %c0_11] : memref<1x1xf32, #tpu.memory_space<smem>>
    memref.store %77, %arg6[%c0_10, %c0_11] : memref<1x1xf32, #tpu.memory_space<smem>>
    %c1_i32_12 = arith.constant 1 : i32
    %79 = arith.cmpi eq, %arg0, %c1_i32_12 : i32
    %80 = arith.extui %79 : i1 to i32
    %c0_i32_13 = arith.constant 0 : i32
    %81 = arith.cmpi ne, %80, %c0_i32_13 : i32
    scf.if %81 {
      %c0_14 = arith.constant 0 : index
      %c0_15 = arith.constant 0 : index
      %82 = vector.load %arg2[%c0_14, %c0_15] : memref<1x128xf32, #tpu.memory_space<vmem>>, vector<1x128xf32>
      %c0_16 = arith.constant 0 : index
      %c0_17 = arith.constant 0 : index
      %83 = vector.load %arg3[%c0_16, %c0_17] : memref<1x128xf32, #tpu.memory_space<vmem>>, vector<1x128xf32>
      %84 = math.log %82 : vector<1x128xf32>
      %cst_18 = arith.constant -1.000000e+02 : f32
      %85 = vector.broadcast %cst_18 : f32 to vector<1x128xf32>
      %86 = arith.maximumf %84, %85 : vector<1x128xf32>
      %cst_19 = arith.constant 1.000000e+00 : f32
      %87 = vector.broadcast %cst_19 : f32 to vector<1x128xf32>
      %88 = arith.subf %87, %82 : vector<1x128xf32>
      %89 = math.log %88 : vector<1x128xf32>
      %cst_20 = arith.constant -1.000000e+02 : f32
      %90 = vector.broadcast %cst_20 : f32 to vector<1x128xf32>
      %91 = arith.maximumf %89, %90 : vector<1x128xf32>
      %92 = arith.mulf %83, %86 : vector<1x128xf32>
      %cst_21 = arith.constant 1.000000e+00 : f32
      %93 = vector.broadcast %cst_21 : f32 to vector<1x128xf32>
      %94 = arith.subf %93, %83 : vector<1x128xf32>
      %95 = arith.mulf %94, %91 : vector<1x128xf32>
      %96 = arith.addf %92, %95 : vector<1x128xf32>
      %cst_22 = arith.constant 0.000000e+00 : f32
      %97 = vector.broadcast %cst_22 : f32 to vector<1x128xf32>
      %98 = arith.subf %97, %96 : vector<1x128xf32>
      %99 = vector.shape_cast %98 : vector<1x128xf32> to vector<1x1x128xf32>
      %cst_23 = arith.constant dense<0.000000e+00> : vector<1xf32>
      %100 = vector.multi_reduction <add>, %99, %cst_23 [1, 2] : vector<1x1x128xf32> to vector<1xf32>
      %101 = vector.shape_cast %100 : vector<1xf32> to vector<1x1x1xf32>
      %102 = vector.extract %101[0, 0, 0] : f32 from vector<1x1x1xf32>
      %cst_24 = arith.constant 1.250000e-01 : f32
      %103 = arith.mulf %102, %cst_24 : f32
      %c0_25 = arith.constant 0 : index
      %c0_26 = arith.constant 0 : index
      %104 = memref.load %arg6[%c0_25, %c0_26] : memref<1x1xf32, #tpu.memory_space<smem>>
      %cst_27 = arith.constant 1.000000e-03 : f32
      %105 = arith.mulf %cst_27, %104 : f32
      %106 = arith.addf %103, %105 : f32
      %c0_28 = arith.constant 0 : index
      %c0_29 = arith.constant 0 : index
      %107 = memref.load %arg6[%c0_28, %c0_29] : memref<1x1xf32, #tpu.memory_space<smem>>
      memref.store %106, %arg6[%c0_28, %c0_29] : memref<1x1xf32, #tpu.memory_space<smem>>
    } else {
    }
    return
  }
  func.func @transform_0(%arg0: i32, %arg1: memref<8xi32, #tpu.memory_space<smem>>) -> (i32, i32) {
    %c0_i32 = arith.constant 0 : i32
    %c0_i32_0 = arith.constant 0 : i32
    %c0_i32_1 = arith.constant 0 : i32
    return %c0_i32, %c0_i32_0 : i32, i32
  }
  func.func @transform_1(%arg0: i32, %arg1: memref<8xi32, #tpu.memory_space<smem>>) -> (i32, i32) {
    %c0_i32 = arith.constant 0 : i32
    %c0_i32_0 = arith.constant 0 : i32
    %c0_i32_1 = arith.constant 0 : i32
    return %c0_i32, %c0_i32_0 : i32, i32
  }
  func.func @transform_2(%arg0: i32, %arg1: memref<8xi32, #tpu.memory_space<smem>>) -> (i32, i32) {
    %c0_i32 = arith.constant 0 : i32
    %c0_i32_0 = arith.constant 0 : i32
    return %arg0, %c0_i32 : i32, i32
  }
  func.func @transform_3(%arg0: i32, %arg1: memref<8xi32, #tpu.memory_space<smem>>) -> (i32, i32) {
    %c0_i32 = arith.constant 0 : i32
    %c0_i32_0 = arith.constant 0 : i32
    return %arg0, %c0_i32 : i32, i32
  }
  func.func @transform_4(%arg0: i32, %arg1: memref<8xi32, #tpu.memory_space<smem>>) -> (i32, i32) {
    %c0_i32 = arith.constant 0 : i32
    %c0_i32_0 = arith.constant 0 : i32
    %c0_i32_1 = arith.constant 0 : i32
    return %c0_i32, %c0_i32_0 : i32, i32
  }
}

</mosaic_0001>

<llo_original>
// kernel: tpu_custom_call.1
$region0: #{tpu_custom_call.1}
  #allocation0 [shape = 'u32[]', space=smem, size = 0x4, offset = 0x4, fixed_abs, tag = 'smem constant byte address 0x4 - core index']
  #allocation1 [shape = 'u32[144,128]{1,0:T(1,128)}', space=vmem, size = 0x12000, scoped, tag = 'internal scratch']
  #allocation2 [shape = 's32[1]{0}', space=sflag, size = 0x4, scoped, tag = 'scoped memory for tpu_custom_call.1']
  #allocation3 [shape = 'u8[512]{0}', space=smem, size = 0x200, scoped, tag = 'prefetched SMEM operand 0']
  %s0 = inlined_call_operand.hbm [shape: s32[8], index: 0, kind: input, shape index: {}]
  %s1 = inlined_call_operand.vmem [shape: f32[1,128], index: 1, kind: input, shape index: {}]
  %s2 = inlined_call_operand.vmem [shape: f32[1,128], index: 2, kind: input, shape index: {}]
  %s3 = inlined_call_operand.hbm [shape: f32[64,128], index: 3, kind: input, shape index: {}]
  %s4 = inlined_call_operand.hbm [shape: f32[64,128], index: 4, kind: input, shape index: {}]
  %s5 = inlined_call_operand.hbm [shape: f32[1,1], index: 5, kind: output, shape index: {}]
  %s6 = sld [smem:[#allocation0]]
  $region65: #{tpu_custom_call.1} parent=0
    _
  %s8 = ssub.s32 1, %s6
  %s9 = scalar_select 0, %s8, %s6
  %11 = dma.hbm_to_smem %s0, 16, [#allocation3], [#allocation2]
  %12 = dma.done [#allocation2], 16
  %13 = sfence
  $region1: #{tpu_custom_call.1} parent=0
    #allocation4 [shape = 'u8[32768]{0}', space=vmem, size = 0x8000, scoped, tag = 'input window, operand 3']
    #allocation5 [shape = 's32[2]{0}', space=sflag, size = 0x8, scoped, tag = 'scoped memory for tpu_custom_call.1']
    #allocation6 [shape = 's32[2]{0}', space=sflag, size = 0x8, scoped, tag = 'scoped memory for tpu_custom_call.1']
    #allocation7 [shape = 'u8[32768]{0}', space=vmem, size = 0x8000, scoped, tag = 'input window, operand 4']
    #allocation8 [shape = 's32[2]{0}', space=sflag, size = 0x8, scoped, tag = 'scoped memory for tpu_custom_call.1']
    #allocation9 [shape = 'u8[512]{0}', space=smem, size = 0x200, scoped, tag = 'output window, operand 0, single buffered']
    %14 = vsyncpa [#allocation5], 0
    %s15 = scalar_lea.sflag [#allocation5], 1
    %16 = vsyncpa %s15, 0
    %17 = vsyncpa [#allocation8], 0
    %s18 = scalar_lea.sflag [#allocation8], 1
    %19 = vsyncpa %s18, 0
    %20 = vsyncpa [#allocation6], 0
    loop: start=0, step=1, limit=4
    $region2: #{tpu_custom_call.1} parent=1 // loop_pre_header
      _
    $region3: #{tpu_custom_call.1} parent=1 // loop_header
      %s22 = sphi 0, %s26
      %p23 = scmp.ge.s32.totalorder %s22, 4
      %s30 = sphi 0, %s30
      %s32 = sphi 0, %s30
      %s33 = sphi 0, %s32
      %s47 = sphi 0, %s33
      %s51 = sphi 0, %s51
      %s53 = sphi 0, %s51
      %s54 = sphi 0, %s53
      %s68 = sphi 0, %s54
      %s74 = sphi 0, %s76
      %s77 = sphi 0, %s74
      %s78 = sphi 0, %s77
      %s94 = sphi 0, %s78
      %s100 = sphi 0, %s102
      %s103 = sphi 0, %s100
      %s104 = sphi 0, %s103
      %s120 = sphi 0, %s104
      %s124 = sphi 0, %s124
      %s126 = sphi 0, %s124
      %s127 = sphi 0, %s126
      %s141 = sphi 0, %s127
    $region4: #{tpu_custom_call.1} parent=1 // loop_header_branch
      %25 = sbr.rel (%p23) target = $region8
    $region5: #{tpu_custom_call.1} parent=1 // loop_body
      %s27 = ssub.s32 %s22, 1
      %s28 = ssub.s32 %s22, 2
      %s29 = sadd.s32 %s22, 1
      %s31 = sadd.s32 %s30, 1
      %p34 = scmp.eq.s32.totalorder %s22, 1
      %p35 = scmp.ne.s32.totalorder %s30, %s32
      %p36 = scmp.eq.s32.totalorder %s22, 0
      %p37 = por %p35, %p36
      %p38 = scmp.ne.s32.totalorder %s30, %s32
      %p39 = scmp.eq.s32.totalorder %s27, 1
      %p40 = por %p38, %p39
      %p41 = scmp.ne.s32.totalorder %s32, %s33
      %p42 = scmp.eq.s32.totalorder %s27, 0
      %p43 = por %p41, %p42
      %p44 = scmp.ne.s32.totalorder %s32, %s33
      %p45 = scmp.eq.s32.totalorder %s28, 1
      %p46 = por %p44, %p45
      %p48 = scmp.ne.s32.totalorder %s33, %s47
      %p49 = scmp.eq.s32.totalorder %s28, 0
      %p50 = por %p48, %p49
      %s52 = sadd.s32 %s51, 1
      %p55 = scmp.eq.s32.totalorder %s22, 1
      %p56 = scmp.ne.s32.totalorder %s51, %s53
      %p57 = scmp.eq.s32.totalorder %s22, 0
      %p58 = por %p56, %p57
      %p59 = scmp.ne.s32.totalorder %s51, %s53
      %p60 = scmp.eq.s32.totalorder %s27, 1
      %p61 = por %p59, %p60
      %p62 = scmp.ne.s32.totalorder %s53, %s54
      %p63 = scmp.eq.s32.totalorder %s27, 0
      %p64 = por %p62, %p63
      %p65 = scmp.ne.s32.totalorder %s53, %s54
      %p66 = scmp.eq.s32.totalorder %s28, 1
      %p67 = por %p65, %p66
      %p69 = scmp.ne.s32.totalorder %s54, %s68
      %p70 = scmp.eq.s32.totalorder %s28, 0
      %p71 = por %p69, %p70
      %s72 = ssub.s32 %s22, %s29
      %p73 = scmp.eq.s32.totalorder %s72, 0
      %s75 = sadd.s32 %s74, 1
      %s76 = scalar_select %p73, %s74, %s75
      %p79 = pneg %p73
      %p80 = scmp.eq.s32.totalorder %s22, 1
      %p81 = por %p79, %p80
      %p82 = scmp.ne.s32.totalorder %s74, %s77
      %p83 = scmp.eq.s32.totalorder %s22, 0
      %p84 = por %p82, %p83
      %p85 = scmp.ne.s32.totalorder %s74, %s77
      %p86 = scmp.eq.s32.totalorder %s27, 1
      %p87 = por %p85, %p86
      %p88 = scmp.ne.s32.totalorder %s77, %s78
      %p89 = scmp.eq.s32.totalorder %s27, 0
      %p90 = por %p88, %p89
      %p91 = scmp.ne.s32.totalorder %s77, %s78
      %p92 = scmp.eq.s32.totalorder %s28, 1
      %p93 = por %p91, %p92
      %p95 = scmp.ne.s32.totalorder %s78, %s94
      %p96 = scmp.eq.s32.totalorder %s28, 0
      %p97 = por %p95, %p96
      %s98 = ssub.s32 %s22, %s29
      %p99 = scmp.eq.s32.totalorder %s98, 0
      %s101 = sadd.s32 %s100, 1
      %s102 = scalar_select %p99, %s100, %s101
      %p105 = pneg %p99
      %p106 = scmp.eq.s32.totalorder %s22, 1
      %p107 = por %p105, %p106
      %p108 = scmp.ne.s32.totalorder %s100, %s103
      %p109 = scmp.eq.s32.totalorder %s22, 0
      %p110 = por %p108, %p109
      %p111 = scmp.ne.s32.totalorder %s100, %s103
      %p112 = scmp.eq.s32.totalorder %s27, 1
      %p113 = por %p111, %p112
      %p114 = scmp.ne.s32.totalorder %s103, %s104
      %p115 = scmp.eq.s32.totalorder %s27, 0
      %p116 = por %p114, %p115
      %p117 = scmp.ne.s32.totalorder %s103, %s104
      %p118 = scmp.eq.s32.totalorder %s28, 1
      %p119 = por %p117, %p118
      %p121 = scmp.ne.s32.totalorder %s104, %s120
      %p122 = scmp.eq.s32.totalorder %s28, 0
      %p123 = por %p121, %p122
      %s125 = sadd.s32 %s124, 1
      %p128 = scmp.eq.s32.totalorder %s22, 1
      %p129 = scmp.ne.s32.totalorder %s124, %s126
      %p130 = scmp.eq.s32.totalorder %s22, 0
      %p131 = por %p129, %p130
      %p132 = scmp.ne.s32.totalorder %s124, %s126
      %p133 = scmp.eq.s32.totalorder %s27, 1
      %p134 = por %p132, %p133
      %p135 = scmp.ne.s32.totalorder %s126, %s127
      %p136 = scmp.eq.s32.totalorder %s27, 0
      %p137 = por %p135, %p136
      %p138 = scmp.ne.s32.totalorder %s126, %s127
      %p139 = scmp.eq.s32.totalorder %s28, 1
      %p140 = por %p138, %p139
      %p142 = scmp.ne.s32.totalorder %s127, %s141
      %p143 = scmp.eq.s32.totalorder %s28, 0
      %p144 = por %p142, %p143
      %p145 = scmp.le.s32.totalorder 1, %s22
      %p146 = scmp.lt.s32.totalorder %s22, 3
      %p147 = pnand %p145, %p146
      %p148 = pneg %p147
      // Predicated region
      $region9: #{tpu_custom_call.1} parent=5 // pred_check
        _
      $region10: #{tpu_custom_call.1} parent=5 // pred_check_branch
        %150 = sbr.rel (%p147) target = $region12
      $region11: #{tpu_custom_call.1} parent=5 // pred_region
        %s151 = ssub.s32 %s22, 1
        // Predicated region
        $region13: #{tpu_custom_call.1} parent=11 // pred_check
          %p152 = pneg %p43
        $region14: #{tpu_custom_call.1} parent=11 // pred_check_branch
          %154 = sbr.rel (%p152) target = $region16
        $region15: #{tpu_custom_call.1} parent=11 // pred_region
          _
        $region16: #{tpu_custom_call.1} parent=11 // pred_fallthru
          _
        // Predicated region
        $region17: #{tpu_custom_call.1} parent=11 // pred_check
          %p155 = pneg %p64
        $region18: #{tpu_custom_call.1} parent=11 // pred_check_branch
          %157 = sbr.rel (%p155) target = $region20
        $region19: #{tpu_custom_call.1} parent=11 // pred_region
          _
        $region20: #{tpu_custom_call.1} parent=11 // pred_fallthru
          _
      $region12: #{tpu_custom_call.1} parent=5 // pred_fallthru
        _
      %p158 = scmp.lt.s32.totalorder %s22, 2
      // Predicated region
      $region21: #{tpu_custom_call.1} parent=5 // pred_check
        %p159 = pneg %p158
      $region22: #{tpu_custom_call.1} parent=5 // pred_check_branch
        %161 = sbr.rel (%p159) target = $region24
      $region23: #{tpu_custom_call.1} parent=5 // pred_region
        // Predicated region
        $region25: #{tpu_custom_call.1} parent=23 // pred_check
          %p162 = pneg %p84
        $region26: #{tpu_custom_call.1} parent=23 // pred_check_branch
          %164 = sbr.rel (%p162) target = $region28
        $region27: #{tpu_custom_call.1} parent=23 // pred_region
          %s165 = sand.u32 %s74, 1
          %s166 = scalar_lea.sflag [#allocation5], %s165
          %s167 = sand.u32 %s74, 1
          %s168 = smul.addr %s167, 32
          %s169 = scalar_lea.vmem [#allocation4], %s168
          %s170 = smul.u32 4, %s22
          %s172 = ssub.s32 512, 512
          %173 = vsyncadd %s166, %s172
          %s174 = smul.addr %s170, 128
          %s175 = scalar_lea.hbm %s3, %s174
          %s176 = sshll.u32 %s169, 4
          %s177 = int_to_ptr.vmem [resolvable:$true] %s176
          %182 = dma.hbm_to_vmem [thread:$0]  %s175, 512, %s177, %s166, 128, 128, 8
        $region28: #{tpu_custom_call.1} parent=23 // pred_fallthru
          _
        // Predicated region
        $region29: #{tpu_custom_call.1} parent=23 // pred_check
          %p183 = pneg %p110
        $region30: #{tpu_custom_call.1} parent=23 // pred_check_branch
          %185 = sbr.rel (%p183) target = $region32
        $region31: #{tpu_custom_call.1} parent=23 // pred_region
          %s186 = sand.u32 %s100, 1
          %s187 = scalar_lea.sflag [#allocation8], %s186
          %s188 = sand.u32 %s100, 1
          %s189 = smul.addr %s188, 32
          %s190 = scalar_lea.vmem [#allocation7], %s189
          %s191 = smul.u32 4, %s22
          %s193 = ssub.s32 512, 512
          %194 = vsyncadd %s187, %s193
          %s195 = smul.addr %s191, 128
          %s196 = scalar_lea.hbm %s4, %s195
          %s197 = sshll.u32 %s190, 4
          %s198 = int_to_ptr.vmem [resolvable:$true] %s197
          %203 = dma.hbm_to_vmem [thread:$0]  %s196, 512, %s198, %s187, 128, 128, 8
        $region32: #{tpu_custom_call.1} parent=23 // pred_fallthru
          _
      $region24: #{tpu_custom_call.1} parent=5 // pred_fallthru
        _
      %p204 = scmp.le.s32.totalorder 1, %s22
      %p205 = scmp.lt.s32.totalorder %s22, 3
      %p206 = pnand %p204, %p205
      %p207 = pneg %p206
      // Predicated region
      $region33: #{tpu_custom_call.1} parent=5 // pred_check
        _
      $region34: #{tpu_custom_call.1} parent=5 // pred_check_branch
        %209 = sbr.rel (%p206) target = $region36
      $region35: #{tpu_custom_call.1} parent=5 // pred_region
        %s210 = ssub.s32 %s22, 1
        %s211 = sand.u32 %s77, 1
        %s212 = scalar_lea.sflag [#allocation5], %s211
        %s213 = sand.u32 %s77, 1
        %s214 = smul.addr %s213, 32
        %s215 = scalar_lea.vmem [#allocation4], %s214
        // Predicated region
        $region37: #{tpu_custom_call.1} parent=35 // pred_check
          %p216 = pneg %p90
        $region38: #{tpu_custom_call.1} parent=35 // pred_check_branch
          %218 = sbr.rel (%p216) target = $region40
        $region39: #{tpu_custom_call.1} parent=35 // pred_region
          %219 = dma.done %s212, 512
        $region40: #{tpu_custom_call.1} parent=35 // pred_fallthru
          _
        %s220 = sand.u32 %s103, 1
        %s221 = scalar_lea.sflag [#allocation8], %s220
        %s222 = sand.u32 %s103, 1
        %s223 = smul.addr %s222, 32
        %s224 = scalar_lea.vmem [#allocation7], %s223
        // Predicated region
        $region41: #{tpu_custom_call.1} parent=35 // pred_check
          %p225 = pneg %p116
        $region42: #{tpu_custom_call.1} parent=35 // pred_check_branch
          %227 = sbr.rel (%p225) target = $region44
        $region43: #{tpu_custom_call.1} parent=35 // pred_region
          %228 = dma.done %s221, 512
        $region44: #{tpu_custom_call.1} parent=35 // pred_fallthru
          _
        %p229 = pneg %p43
        %p230 = pneg %p40
        %p231 = pneg %p64
        %p232 = pneg %p61
        %s233 = sand.u32 %s77, 1
        %s234 = scalar_lea.sflag [#allocation5], %s233
        %s235 = sand.u32 %s77, 1
        %s236 = smul.addr %s235, 32
        %s237 = scalar_lea.vmem [#allocation4], %s236
        %p238 = pneg %p90
        %p239 = pneg %p87
        %s240 = sand.u32 %s103, 1
        %s241 = scalar_lea.sflag [#allocation8], %s240
        %s242 = sand.u32 %s103, 1
        %s243 = smul.addr %s242, 32
        %s244 = scalar_lea.vmem [#allocation7], %s243
        %p245 = pneg %p116
        %p246 = pneg %p113
        %p247 = pneg %p137
        %p248 = pneg %p134
        %s249 = smul.u32 4, %s27
        %s250 = smul.u32 4, %s27
        %p251 = scmp.eq.s32.totalorder %s27, 0
        // Predicated region
        $region45: #{tpu_custom_call.1} parent=35 // pred_check
          %p252 = pneg %p251
        $region46: #{tpu_custom_call.1} parent=35 // pred_check_branch
          %254 = sbr.rel (%p252) target = $region48
        $region47: #{tpu_custom_call.1} parent=35 // pred_region
          %s255 = scalar_lea.smem [#allocation9], 0
          %256 = sst [smem:[%s255]] 0.0
        $region48: #{tpu_custom_call.1} parent=35 // pred_fallthru
          _
        %v257 = vld [vmem:[%s224] sm:$0xff]
        %v258 = vld [vmem:[%s224 + $0x8] sm:$0xff]
        %v259 = vld [vmem:[%s224 + $0x10] sm:$0xff]
        %v260 = vld [vmem:[%s224 + $0x18] sm:$0xff]
        %v261 = vld [vmem:[%s215] sm:$0xff]
        %v262 = vld [vmem:[%s215 + $0x8] sm:$0xff]
        %v263 = vld [vmem:[%s215 + $0x10] sm:$0xff]
        %v264 = vld [vmem:[%s215 + $0x18] sm:$0xff]
        %v265 = vsub.f32 %v257, %v261
        %v266 = vsub.f32 %v258, %v262
        %v267 = vsub.f32 %v259, %v263
        %v268 = vsub.f32 %v260, %v264
        %v269 = vmax.f32 %v265, 0.0
        %v270 = vmax.f32 %v266, 0.0
        %v271 = vmax.f32 %v267, 0.0
        %v272 = vmax.f32 %v268, 0.0
        %273 = vadd.xlane.f32.xlu0 %v269
        %v274 = vpop.xlane.xlu0 %273
        %275 = vadd.xlane.f32.xlu0 %v270
        %v276 = vpop.xlane.xlu0 %275
        %277 = vadd.xlane.f32.xlu0 %v271
        %v278 = vpop.xlane.xlu0 %277
        %279 = vadd.xlane.f32.xlu0 %v272
        %v280 = vpop.xlane.xlu0 %279
        %s281 = smul.u32 %s27, 32
        %v282 = vlaneseq
        %v283 = vshrl.u32 %v282, 7
        %v284 = vadd.s32 %v283, 8
        %v285 = vadd.s32 %v283, 16
        %v286 = vadd.s32 %v283, 24
        %v287 = vstv %s281
        %v288 = vadd.s32 %v283, %v287
        %v289 = vadd.s32 %v284, %v287
        %v290 = vadd.s32 %v285, %v287
        %v291 = vadd.s32 %v286, %v287
        %s292 = sld [smem:[#allocation3]]
        %v293 = vstv %s292
        %vm294 = vcmp.eq.s32.totalorder %v288, %v293
        %vm295 = vcmp.eq.s32.totalorder %v289, %v293
        %vm296 = vcmp.eq.s32.totalorder %v290, %v293
        %vm297 = vcmp.eq.s32.totalorder %v291, %v293
        %v298 = vsel %vm294, 1, 0
        %v299 = vsel %vm295, 1, 0
        %v300 = vsel %vm296, 1, 0
        %v301 = vsel %vm297, 1, 0
        %v302 = vcvt.s32.f32 %v298
        %v303 = vcvt.s32.f32 %v299
        %v304 = vcvt.s32.f32 %v300
        %v305 = vcvt.s32.f32 %v301
        %v306 = vadd.f32 %v302, 0.0
        %v307 = vadd.f32 %v303, 0.0
        %v308 = vadd.f32 %v304, 0.0
        %v309 = vadd.f32 %v305, 0.0
        %s310 = sld [smem:[#allocation3 + $0x1]]
        %v311 = vstv %s310
        %vm312 = vcmp.eq.s32.totalorder %v288, %v311
        %vm313 = vcmp.eq.s32.totalorder %v289, %v311
        %vm314 = vcmp.eq.s32.totalorder %v290, %v311
        %vm315 = vcmp.eq.s32.totalorder %v291, %v311
        %v316 = vsel %vm312, 1, 0
        %v317 = vsel %vm313, 1, 0
        %v318 = vsel %vm314, 1, 0
        %v319 = vsel %vm315, 1, 0
        %v320 = vcvt.s32.f32 %v316
        %v321 = vcvt.s32.f32 %v317
        %v322 = vcvt.s32.f32 %v318
        %v323 = vcvt.s32.f32 %v319
        %v324 = vadd.f32 %v306, %v320
        %v325 = vadd.f32 %v307, %v321
        %v326 = vadd.f32 %v308, %v322
        %v327 = vadd.f32 %v309, %v323
        %s328 = sld [smem:[#allocation3 + $0x2]]
        %v329 = vstv %s328
        %vm330 = vcmp.eq.s32.totalorder %v288, %v329
        %vm331 = vcmp.eq.s32.totalorder %v289, %v329
        %vm332 = vcmp.eq.s32.totalorder %v290, %v329
        %vm333 = vcmp.eq.s32.totalorder %v291, %v329
        %v334 = vsel %vm330, 1, 0
        %v335 = vsel %vm331, 1, 0
        %v336 = vsel %vm332, 1, 0
        %v337 = vsel %vm333, 1, 0
        %v338 = vcvt.s32.f32 %v334
        %v339 = vcvt.s32.f32 %v335
        %v340 = vcvt.s32.f32 %v336
        %v341 = vcvt.s32.f32 %v337
        %v342 = vadd.f32 %v324, %v338
        %v343 = vadd.f32 %v325, %v339
        %v344 = vadd.f32 %v326, %v340
        %v345 = vadd.f32 %v327, %v341
        %s346 = sld [smem:[#allocation3 + $0x3]]
        %v347 = vstv %s346
        %vm348 = vcmp.eq.s32.totalorder %v288, %v347
        %vm349 = vcmp.eq.s32.totalorder %v289, %v347
        %vm350 = vcmp.eq.s32.totalorder %v290, %v347
        %vm351 = vcmp.eq.s32.totalorder %v291, %v347
        %v352 = vsel %vm348, 1, 0
        %v353 = vsel %vm349, 1, 0
        %v354 = vsel %vm350, 1, 0
        %v355 = vsel %vm351, 1, 0
        %v356 = vcvt.s32.f32 %v352
        %v357 = vcvt.s32.f32 %v353
        %v358 = vcvt.s32.f32 %v354
        %v359 = vcvt.s32.f32 %v355
        %v360 = vadd.f32 %v342, %v356
        %v361 = vadd.f32 %v343, %v357
        %v362 = vadd.f32 %v344, %v358
        %v363 = vadd.f32 %v345, %v359
        %s364 = sld [smem:[#allocation3 + $0x4]]
        %v365 = vstv %s364
        %vm366 = vcmp.eq.s32.totalorder %v288, %v365
        %vm367 = vcmp.eq.s32.totalorder %v289, %v365
        %vm368 = vcmp.eq.s32.totalorder %v290, %v365
        %vm369 = vcmp.eq.s32.totalorder %v291, %v365
        %v370 = vsel %vm366, 1, 0
        %v371 = vsel %vm367, 1, 0
        %v372 = vsel %vm368, 1, 0
        %v373 = vsel %vm369, 1, 0
        %v374 = vcvt.s32.f32 %v370
        %v375 = vcvt.s32.f32 %v371
        %v376 = vcvt.s32.f32 %v372
        %v377 = vcvt.s32.f32 %v373
        %v378 = vadd.f32 %v360, %v374
        %v379 = vadd.f32 %v361, %v375
        %v380 = vadd.f32 %v362, %v376
        %v381 = vadd.f32 %v363, %v377
        %s382 = sld [smem:[#allocation3 + $0x5]]
        %v383 = vstv %s382
        %vm384 = vcmp.eq.s32.totalorder %v288, %v383
        %vm385 = vcmp.eq.s32.totalorder %v289, %v383
        %vm386 = vcmp.eq.s32.totalorder %v290, %v383
        %vm387 = vcmp.eq.s32.totalorder %v291, %v383
        %v388 = vsel %vm384, 1, 0
        %v389 = vsel %vm385, 1, 0
        %v390 = vsel %vm386, 1, 0
        %v391 = vsel %vm387, 1, 0
        %v392 = vcvt.s32.f32 %v388
        %v393 = vcvt.s32.f32 %v389
        %v394 = vcvt.s32.f32 %v390
        %v395 = vcvt.s32.f32 %v391
        %v396 = vadd.f32 %v378, %v392
        %v397 = vadd.f32 %v379, %v393
        %v398 = vadd.f32 %v380, %v394
        %v399 = vadd.f32 %v381, %v395
        %s400 = sld [smem:[#allocation3 + $0x6]]
        %v401 = vstv %s400
        %vm402 = vcmp.eq.s32.totalorder %v288, %v401
        %vm403 = vcmp.eq.s32.totalorder %v289, %v401
        %vm404 = vcmp.eq.s32.totalorder %v290, %v401
        %vm405 = vcmp.eq.s32.totalorder %v291, %v401
        %v406 = vsel %vm402, 1, 0
        %v407 = vsel %vm403, 1, 0
        %v408 = vsel %vm404, 1, 0
        %v409 = vsel %vm405, 1, 0
        %v410 = vcvt.s32.f32 %v406
        %v411 = vcvt.s32.f32 %v407
        %v412 = vcvt.s32.f32 %v408
        %v413 = vcvt.s32.f32 %v409
        %v414 = vadd.f32 %v396, %v410
        %v415 = vadd.f32 %v397, %v411
        %v416 = vadd.f32 %v398, %v412
        %v417 = vadd.f32 %v399, %v413
        %s418 = sld [smem:[#allocation3 + $0x7]]
        %v419 = vstv %s418
        %vm420 = vcmp.eq.s32.totalorder %v288, %v419
        %vm421 = vcmp.eq.s32.totalorder %v289, %v419
        %vm422 = vcmp.eq.s32.totalorder %v290, %v419
        %vm423 = vcmp.eq.s32.totalorder %v291, %v419
        %v424 = vsel %vm420, 1, 0
        %v425 = vsel %vm421, 1, 0
        %v426 = vsel %vm422, 1, 0
        %v427 = vsel %vm423, 1, 0
        %v428 = vcvt.s32.f32 %v424
        %v429 = vcvt.s32.f32 %v425
        %v430 = vcvt.s32.f32 %v426
        %v431 = vcvt.s32.f32 %v427
        %v432 = vadd.f32 %v414, %v428
        %v433 = vadd.f32 %v415, %v429
        %v434 = vadd.f32 %v416, %v430
        %v435 = vadd.f32 %v417, %v431
        %s436 = sld [smem:[#allocation9]]
        %v437 = vmul.f32 %v432, %v274
        %v438 = vmul.f32 %v433, %v276
        %v439 = vmul.f32 %v434, %v278
        %v440 = vmul.f32 %v435, %v280
        %vm441 = vcmask 7168
        %v442 = vsel %vm441, %v437, 0.0
        %v443 = vsel %vm441, %v438, 0.0
        %v444 = vadd.f32 %v442, %v443
        %v445 = vsel %vm441, %v439, 0.0
        %v446 = vadd.f32 %v444, %v445
        %v447 = vsel %vm441, %v440, 0.0
        %v448 = vadd.f32 %v446, %v447
        %449 = vadd.xlane.f32.xlu0 %v448
        %v450 = vpop.xlane.xlu0 %449
        %v451 = vrot.slane %v450, 4
        %v452 = vadd.f32 %v450, %v451
        %v453 = vrot.slane %v452, 2
        %v454 = vadd.f32 %v452, %v453
        %v455 = vrot.slane %v454, 1
        %v456 = vadd.f32 %v454, %v455
        %s457 = vtos %v456
        %s458 = sadd.f32 %s436, %s457
        %s459 = scalar_lea.smem [#allocation9], 0
        %460 = sst [smem:[%s459]] %s458
        %p461 = scmp.eq.s32.totalorder %s27, 1
        // Predicated region
        $region49: #{tpu_custom_call.1} parent=35 // pred_check
          %p462 = pneg %p461
        $region50: #{tpu_custom_call.1} parent=35 // pred_check_branch
          %464 = sbr.rel (%p462) target = $region52
        $region51: #{tpu_custom_call.1} parent=35 // pred_region
          %v465 = vld [vmem:[%s1] sm:$0x1]
          %v466 = vld [vmem:[%s2] sm:$0x1]
          %v467 = vlog2.pop %v465
          %v468 = vmul.f32 %v467, 0.6931472
          %v469 = vmax.f32 %v468, -100.0
          %v470 = vsub.f32 1.0, %v465
          %v471 = vlog2.pop %v470
          %v472 = vmul.f32 %v471, 0.6931472
          %v473 = vmax.f32 %v472, -100.0
          %v474 = vmul.f32 %v466, %v469
          %v475 = vsub.f32 1.0, %v466
          %v476 = vmul.f32 %v475, %v473
          %v477 = vadd.f32 %v474, %v476
          %v478 = vsub.f32 0.0, %v477
          %vm479 = vcmask 1040384
          %v480 = vsel %vm479, %v478, 0.0
          %481 = vadd.xlane.f32.xlu0 %v480
          %v482 = vpop.xlane.xlu0 %481
          %v483 = vrot.slane %v482, 4
          %v484 = vadd.f32 %v482, %v483
          %v485 = vrot.slane %v484, 2
          %v486 = vadd.f32 %v484, %v485
          %v487 = vrot.slane %v486, 1
          %v488 = vadd.f32 %v486, %v487
          %s489 = vtos %v488
          %s490 = smul.f32 %s489, 0.125
          %s491 = sld [smem:[#allocation9]]
          %s492 = smul.f32 %s491, 0.001
          %s493 = sadd.f32 %s490, %s492
          %494 = sst [smem:[%s459]] %s493
        $region52: #{tpu_custom_call.1} parent=35 // pred_fallthru
          _
        // Predicated region
        $region53: #{tpu_custom_call.1} parent=35 // pred_check
          %p495 = pneg %p134
        $region54: #{tpu_custom_call.1} parent=35 // pred_check_branch
          %497 = sbr.rel (%p495) target = $region56
        $region55: #{tpu_custom_call.1} parent=35 // pred_region
          %s499 = ssub.s32 16, 16
          %500 = vsyncadd [#allocation6], %s499
          %503 = dma.smem_to_hbm [#allocation9], 16, %s5, [#allocation6]
        $region56: #{tpu_custom_call.1} parent=35 // pred_fallthru
          _
        // Predicated region
        $region57: #{tpu_custom_call.1} parent=35 // pred_check
          %p504 = pneg %p134
        $region58: #{tpu_custom_call.1} parent=35 // pred_check_branch
          %506 = sbr.rel (%p504) target = $region60
        $region59: #{tpu_custom_call.1} parent=35 // pred_region
          %507 = dma.done [#allocation6], 16
        $region60: #{tpu_custom_call.1} parent=35 // pred_fallthru
          _
        %508 = sfence
      $region36: #{tpu_custom_call.1} parent=5 // pred_fallthru
        _
      %p509 = scmp.le.s32.totalorder 2, %s22
      // Predicated region
      $region61: #{tpu_custom_call.1} parent=5 // pred_check
        %p510 = pneg %p509
      $region62: #{tpu_custom_call.1} parent=5 // pred_check_branch
        %512 = sbr.rel (%p510) target = $region64
      $region63: #{tpu_custom_call.1} parent=5 // pred_region
        %s513 = ssub.s32 %s22, 2
      $region64: #{tpu_custom_call.1} parent=5 // pred_fallthru
        _
    $region6: #{tpu_custom_call.1} parent=1 // loop_footer
      %s26 = sadd.s32 1, %s22
    $region7: #{tpu_custom_call.1} parent=1 // loop_footer_branch
      %21 = sbr.rel target = $region3
    $region8: #{tpu_custom_call.1} parent=1 // loop_exit
      _
    %514 = vsyncpa [#allocation5], 1
    %s515 = scalar_lea.sflag [#allocation5], 1
    %516 = vsyncpa %s515, 1
    %517 = vsyncpa [#allocation8], 1
    %s518 = scalar_lea.sflag [#allocation8], 1
    %519 = vsyncpa %s518, 1
    %520 = vsyncpa [#allocation6], 1
    %s521 = scalar_lea.sflag [#allocation6], 1
    %522 = vsyncpa %s521, 1

</llo_original>
